<compile_context>
chip_gen: v6e
topology: v6e:2x2x1
jax: 0.10.0
libtpu: 0.0.40
codegen_flags: <defaults>
</compile_context>

<pallas_src>
import jax
import jax.numpy as jnp
from jax.experimental import pallas as pl
from jax.experimental.pallas import tpu as pltpu


def _cdiv(a, b):
    return -(-a // b)


def _round_up(v, m):
    return _cdiv(v, m) * m


def _pick_tm(batch, cap=512):
    """Rows per batch tile: multiple of 8, <= cap, and an even tile count whenever
    batch spans more than one minimal tile (keeps both v7x TensorCores busy)."""
    if batch <= 8:
        return 8
    pairs = _cdiv(batch, 2 * cap)
    tiles = 2 * pairs
    return min(cap, _round_up(_cdiv(batch, tiles), 8))


def _make_kernel(TM, TK, k_tail_valid, has_k_tail):
    n_lane_blocks = TK // 128

    def _lane_block_prod(x_ref, w_row, c, n_valid):
        # One vreg-aligned 128-lane block: pure VPU multiply (+ optional static mask).
        lo = c * 128
        prod = x_ref[:, lo:lo + 128] * w_row[:, lo:lo + 128]      # (TM,128)*(1,128)
        if n_valid < 128:
            # Static mask for the ragged K tail: stale VMEM lanes (possibly NaN/Inf)
            # must not enter the reduction, so mask the product, not just w.
            col = jax.lax.broadcasted_iota(jnp.int32, (TM, 128), 1)
            prod = jnp.where(col < n_valid, prod, 0.0)
        return prod

    def _accumulate(acc_ref, x_ref, w_row, num_blocks, last_valid):
        # Per-lane partial sums only (VPU adds, no cross-lane movement).
        part = _lane_block_prod(x_ref, w_row, 0,
                                128 if num_blocks > 1 else last_valid)
        for c in range(1, num_blocks):
            nv = 128 if c < num_blocks - 1 else last_valid
            part = part + _lane_block_prod(x_ref, w_row, c, nv)
        acc_ref[...] += part

    def kernel(x_ref, w_ref, b_ref, o_ref, acc_ref):
        k = pl.program_id(1)
        nk = pl.num_programs(1)

        @pl.when(k == 0)
        def _init():
            acc_ref[...] = jnp.zeros_like(acc_ref)

        # Resident weight: slice the current TK window out of the full padded row.
        start = pl.multiple_of(k * TK, 128)
        w_row = w_ref[:, pl.ds(start, TK)]                        # (1, TK)

        if has_k_tail:
            @pl.when(k < nk - 1)
            def _full_block():
                _accumulate(acc_ref, x_ref, w_row, n_lane_blocks, 128)

            @pl.when(k == nk - 1)
            def _tail_block():
                nb = _cdiv(k_tail_valid, 128)                     # static
                lv = k_tail_valid - (nb - 1) * 128                # static, 1..128
                _accumulate(acc_ref, x_ref, w_row, nb, lv)
        else:
            _accumulate(acc_ref, x_ref, w_row, n_lane_blocks, 128)

        @pl.when(k == nk - 1)
        def _finalize():
            # Single cross-lane reduce per batch tile (hoisted out of the K loop).
            total = jnp.sum(acc_ref[...], axis=-1, keepdims=True)  # (TM, 1)
            bias = b_ref[0, 0]                                     # SMEM scalar
            o_ref[...] = (total + bias).astype(o_ref.dtype)

    return kernel


def linear_regression_forward(x, weight, bias):
    """
    x:      (batch, in_features) float32
    weight: (1, in_features)     float32   (PyTorch nn.Linear layout)
    bias:   (1,)                 float32
    returns (batch, 1) float32, matching  x @ weight.T + bias
    """
    batch, in_features = x.shape

    TM = _pick_tm(batch)
    TK = min(2048, _round_up(in_features, 128))
    nk = _cdiv(in_features, TK)
    feat_p = nk * TK
    k_tail_valid = in_features - (nk - 1) * TK
    has_k_tail = (in_features % TK) != 0

    # Only the tiny weight row is zero-padded (so the resident block shape and the
    # in-kernel pl.ds windows are always in-bounds); x is streamed as-is.
    w_p = weight
    if feat_p != in_features:
        w_p = jnp.pad(weight, ((0, 0), (0, feat_p - in_features)))
    b2d = bias.reshape(1, 1).astype(jnp.float32)

    grid = (_cdiv(batch, TM), nk)   # reduction (K) axis last

    kernel = _make_kernel(TM, TK, k_tail_valid, has_k_tail)

    return pl.pallas_call(
        kernel,
        out_shape=jax.ShapeDtypeStruct((batch, 1), x.dtype),
        grid_spec=pltpu.PrefetchScalarGridSpec(
            num_scalar_prefetch=0,
            grid=grid,
            in_specs=[
                pl.BlockSpec((TM, TK), lambda i, k: (i, k)),        # streamed x
                pl.BlockSpec((1, feat_p), lambda i, k: (0, 0)),     # resident weight
                pl.BlockSpec(memory_space=pltpu.MemorySpace.SMEM),  # bias scalar
            ],
            out_specs=pl.BlockSpec((TM, 1), lambda i, k: (i, 0)),
            scratch_shapes=[pltpu.VMEM((TM, 128), jnp.float32)],
        ),
        compiler_params=pltpu.CompilerParams(
            dimension_semantics=("parallel", "arbitrary"),
        ),
    )(x, w_p, b2d)


if __name__ == "__main__":
    batch, in_features = 8, 32

    key = jax.random.PRNGKey(0)
    kx, kw, kb = jax.random.split(key, 3)

    # Deterministic synthetic parameters (shapes from nn.Linear(in_features, 1)).
    x = jax.random.normal(kx, (batch, in_features), dtype=jnp.float32)
    weight = jax.random.normal(kw, (1, in_features), dtype=jnp.float32) * 0.1
    bias = jax.random.normal(kb, (1,), dtype=jnp.float32) * 0.1

    out = jax.block_until_ready(linear_regression_forward(x, weight, bias))

    # Correctness check against a plain-JAX reference of the PyTorch forward.
    ref = x @ weight.T + bias
    assert out.shape == (batch, 1)
    assert jnp.allclose(out, ref, atol=1e-5, rtol=1e-5)

    # Larger shape exercising: multiple (even count) batch tiles for v7x megacore,
    # K accumulation across grid steps, and the in-kernel K-tail lane mask
    # (3000 % 2048 != 0) -- all without padding x.
    x2 = jax.random.normal(jax.random.PRNGKey(1), (1037, 3000), dtype=jnp.float32)
    w2 = jax.random.normal(kw, (1, 3000), dtype=jnp.float32) * 0.05
    out2 = jax.block_until_ready(linear_regression_forward(x2, w2, bias))
    ref2 = x2 @ w2.T + bias
    assert out2.shape == (1037, 1)
    assert jnp.allclose(out2, ref2, atol=1e-3, rtol=1e-3)

    print("KERNEL_OK")
</pallas_src>

<mosaic_0001>
module attributes {stable_mosaic.version = 11 : i64} {
  func.func @kernel(%arg0: i32, %arg1: i32, %arg2: memref<8x128xf32, #tpu.memory_space<vmem>>, %arg3: memref<1x128xf32, #tpu.memory_space<vmem>>, %arg4: memref<1x1xf32, #tpu.memory_space<smem>>, %arg5: memref<8x1xf32, #tpu.memory_space<vmem>>, %arg6: memref<8x128xf32, #tpu.memory_space<vmem>>) attributes {dimension_semantics = [#tpu.dimension_semantics<parallel>, #tpu.dimension_semantics<arbitrary>], iteration_bounds = array<i64: 1, 1>, scalar_prefetch = 0 : i64, scratch_operands = 1 : i64, tpu.core_type = #tpu.core_type<tc>, window_params = [{transform_indices = @transform_0, window_bounds = array<i64: 8, 128>}, {pipeline_mode = #tpu.pipeline_mode<synchronous>, transform_indices = @transform_1, window_bounds = array<i64: 1, 128>}, {transform_indices = @transform_2, window_bounds = array<i64: 1, 1>}, {transform_indices = @transform_3, window_bounds = array<i64: 8, 1>}]} {
    %c0_i32 = arith.constant 0 : i32
    %0 = arith.cmpi eq, %arg1, %c0_i32 : i32
    %1 = arith.extui %0 : i1 to i32
    %c0_i32_0 = arith.constant 0 : i32
    %2 = arith.cmpi ne, %1, %c0_i32_0 : i32
    scf.if %2 {
      %cst = arith.constant 0.000000e+00 : f32
      %16 = vector.broadcast %cst : f32 to vector<8x128xf32>
      %c0_7 = arith.constant 0 : index
      %c0_8 = arith.constant 0 : index
      %17 = vector.load %arg6[%c0_7, %c0_8] : memref<8x128xf32, #tpu.memory_space<vmem>>, vector<8x128xf32>
      tpu.vector_store %arg6[%c0_7, %c0_8], %16 {strides = array<i32>} : memref<8x128xf32, #tpu.memory_space<vmem>>, vector<8x128xf32>,
    } else {
    }
    %c128_i32 = arith.constant 128 : i32
    %3 = arith.muli %arg1, %c128_i32 : i32
    %4 = tpu.assume_multiple %3, 128 : i32
    %c0 = arith.constant 0 : index
    %5 = arith.index_cast %4 : i32 to index
    %6 = vector.load %arg3[%c0, %5] : memref<1x128xf32, #tpu.memory_space<vmem>>, vector<1x128xf32>
    %c0_i32_1 = arith.constant 0 : i32
    %7 = arith.cmpi slt, %arg1, %c0_i32_1 : i32
    %8 = arith.extui %7 : i1 to i32
    %c0_i32_2 = arith.constant 0 : i32
    %9 = arith.cmpi ne, %8, %c0_i32_2 : i32
    scf.if %9 {
      %c0_7 = arith.constant 0 : index
      %c0_8 = arith.constant 0 : index
      %16 = vector.load %arg2[%c0_7, %c0_8] : memref<8x128xf32, #tpu.memory_space<vmem>>, vector<8x128xf32>
      %17 = vector.broadcast %6 : vector<1x128xf32> to vector<8x128xf32>
      %18 = arith.mulf %16, %17 : vector<8x128xf32>
      %c0_9 = arith.constant 0 : index
      %c0_10 = arith.constant 0 : index
      %19 = vector.load %arg6[%c0_9, %c0_10] : memref<8x128xf32, #tpu.memory_space<vmem>>, vector<8x128xf32>
      %20 = arith.addf %19, %18 : vector<8x128xf32>
      %c0_11 = arith.constant 0 : index
      %c0_12 = arith.constant 0 : index
      %21 = vector.load %arg6[%c0_11, %c0_12] : memref<8x128xf32, #tpu.memory_space<vmem>>, vector<8x128xf32>
      tpu.vector_store %arg6[%c0_11, %c0_12], %20 {strides = array<i32>} : memref<8x128xf32, #tpu.memory_space<vmem>>, vector<8x128xf32>,
    } else {
    }
    %c0_i32_3 = arith.constant 0 : i32
    %10 = arith.cmpi eq, %arg1, %c0_i32_3 : i32
    %11 = arith.extui %10 : i1 to i32
    %c0_i32_4 = arith.constant 0 : i32
    %12 = arith.cmpi ne, %11, %c0_i32_4 : i32
    scf.if %12 {
      %c0_7 = arith.constant 0 : index
      %c0_8 = arith.constant 0 : index
      %16 = vector.load %arg2[%c0_7, %c0_8] : memref<8x128xf32, #tpu.memory_space<vmem>>, vector<8x128xf32>
      %17 = vector.broadcast %6 : vector<1x128xf32> to vector<8x128xf32>
      %18 = arith.mulf %16, %17 : vector<8x128xf32>
      %19 = tpu.iota {dimensions = array<i32: 1>} : vector<8x128xi32>
      %c32_i32 = arith.constant 32 : i32
      %20 = vector.broadcast %c32_i32 : i32 to vector<8x128xi32>
      %21 = arith.cmpi slt, %19, %20 : vector<8x128xi32>
      %cst = arith.constant 0.000000e+00 : f32
      %22 = vector.broadcast %cst : f32 to vector<8x128xf32>
      %23 = arith.select %21, %18, %22 : vector<8x128xi1>, vector<8x128xf32>
      %c0_9 = arith.constant 0 : index
      %c0_10 = arith.constant 0 : index
      %24 = vector.load %arg6[%c0_9, %c0_10] : memref<8x128xf32, #tpu.memory_space<vmem>>, vector<8x128xf32>
      %25 = arith.addf %24, %23 : vector<8x128xf32>
      %c0_11 = arith.constant 0 : index
      %c0_12 = arith.constant 0 : index
      %26 = vector.load %arg6[%c0_11, %c0_12] : memref<8x128xf32, #tpu.memory_space<vmem>>, vector<8x128xf32>
      tpu.vector_store %arg6[%c0_11, %c0_12], %25 {strides = array<i32>} : memref<8x128xf32, #tpu.memory_space<vmem>>, vector<8x128xf32>,
    } else {
    }
    %c0_i32_5 = arith.constant 0 : i32
    %13 = arith.cmpi eq, %arg1, %c0_i32_5 : i32
    %14 = arith.extui %13 : i1 to i32
    %c0_i32_6 = arith.constant 0 : i32
    %15 = arith.cmpi ne, %14, %c0_i32_6 : i32
    scf.if %15 {
      %c0_7 = arith.constant 0 : index
      %c0_8 = arith.constant 0 : index
      %16 = vector.load %arg6[%c0_7, %c0_8] : memref<8x128xf32, #tpu.memory_space<vmem>>, vector<8x128xf32>
      %cst = arith.constant dense<0.000000e+00> : vector<8xf32>
      %17 = vector.multi_reduction <add>, %16, %cst [1] : vector<8x128xf32> to vector<8xf32>
      %18 = vector.shape_cast %17 : vector<8xf32> to vector<8x1xf32>
      %c0_9 = arith.constant 0 : index
      %c0_10 = arith.constant 0 : index
      %19 = memref.load %arg4[%c0_9, %c0_10] : memref<1x1xf32, #tpu.memory_space<smem>>
      %20 = vector.broadcast %19 : f32 to vector<8x1xf32>
      %21 = arith.addf %18, %20 : vector<8x1xf32>
      %c0_11 = arith.constant 0 : index
      %c0_12 = arith.constant 0 : index
      %22 = vector.load %arg5[%c0_11, %c0_12] : memref<8x1xf32, #tpu.memory_space<vmem>>, vector<8x1xf32>
      tpu.vector_store %arg5[%c0_11, %c0_12], %21 {strides = array<i32>} : memref<8x1xf32, #tpu.memory_space<vmem>>, vector<8x1xf32>,
    } else {
    }
    return
  }
  func.func @transform_0(%arg0: i32, %arg1: i32) -> (i32, i32) {
    %c0_i32 = arith.constant 0 : i32
    return %arg0, %arg1 : i32, i32
  }
  func.func @transform_1(%arg0: i32, %arg1: i32) -> (i32, i32) {
    %c0_i32 = arith.constant 0 : i32
    %c0_i32_0 = arith.constant 0 : i32
    %c0_i32_1 = arith.constant 0 : i32
    return %c0_i32, %c0_i32_0 : i32, i32
  }
  func.func @transform_2(%arg0: i32, %arg1: i32) -> (i32, i32) {
    %c0_i32 = arith.constant 0 : i32
    %c0_i32_0 = arith.constant 0 : i32
    %c0_i32_1 = arith.constant 0 : i32
    return %c0_i32, %c0_i32_0 : i32, i32
  }
  func.func @transform_3(%arg0: i32, %arg1: i32) -> (i32, i32) {
    %c0_i32 = arith.constant 0 : i32
    %c0_i32_0 = arith.constant 0 : i32
    return %arg0, %c0_i32 : i32, i32
  }
}

</mosaic_0001>

<llo_original>
// kernel: tpu_custom_call.1
$region0: #{tpu_custom_call.1}
  #allocation0 [shape = 'u32[]', space=smem, size = 0x4, offset = 0x4, fixed_abs, tag = 'smem constant byte address 0x4 - core index']
  #allocation1 [shape = 'u32[144,128]{1,0:T(1,128)}', space=vmem, size = 0x12000, scoped, tag = 'internal scratch']
  #allocation2 [shape = 'f32[8,128]{1,0:T(8,128)}', space=vmem, size = 0x1000, scoped, tag = 'scratch operand']
  #allocation3 [shape = 'f32[1,1]{1,0:T(1,128)S(6)}', space=smem, size = 0x200, scoped, tag = 'scoped memory for tpu_custom_call.1']
  %s0 = inlined_call_operand.hbm [shape: f32[8,32], index: 0, kind: input, shape index: {}]
  %s1 = inlined_call_operand.vmem [shape: f32[1,128], index: 1, kind: input, shape index: {}]
  %s2 = inlined_call_operand.<no memory space> [shape: f32[1,1], index: 2, kind: input, shape index: {}]
  %s3 = inlined_call_operand.vmem [shape: f32[8,1], index: 3, kind: output, shape index: {}]
  %s4 = sld [smem:[#allocation0]]
  $region38: #{tpu_custom_call.1} parent=0
    _
  %s6 = ssub.s32 1, %s4
  %s7 = scalar_select 0, %s6, %s4
  %8 = sst [smem:[#allocation3]] %s2
  $region1: #{tpu_custom_call.1} parent=0
    #allocation4 [shape = 'u8[4096]{0}', space=vmem, size = 0x1000, scoped, tag = 'input window, operand 0, single buffered']
    #allocation5 [shape = 's32[1]{0}', space=sflag, size = 0x4, scoped, tag = 'scoped memory for tpu_custom_call.1']
    %9 = vsyncpa [#allocation5], 0
    // Predicated region
    $region2: #{tpu_custom_call.1} parent=1 // pred_check
      _
    $region3: #{tpu_custom_call.1} parent=1 // pred_check_branch
      %11 = sbr.rel (0) target = $region5
    $region4: #{tpu_custom_call.1} parent=1 // pred_region
      %s13 = ssub.s32 128, 128
      %14 = vsyncadd [#allocation5], %s13
      %s16 = sshll.u32 [#allocation4], 4
      %s17 = int_to_ptr.vmem [resolvable:$true] %s16
      %19 = dma.hbm_to_vmem [thread:$0]  %s0, 128, %s17, [#allocation5]
    $region5: #{tpu_custom_call.1} parent=1 // pred_fallthru
      _
    // Predicated region
    $region6: #{tpu_custom_call.1} parent=1 // pred_check
      _
    $region7: #{tpu_custom_call.1} parent=1 // pred_check_branch
      %21 = sbr.rel (0) target = $region9
    $region8: #{tpu_custom_call.1} parent=1 // pred_region
      _
    $region9: #{tpu_custom_call.1} parent=1 // pred_fallthru
      _
    // Predicated region
    $region10: #{tpu_custom_call.1} parent=1 // pred_check
      _
    $region11: #{tpu_custom_call.1} parent=1 // pred_check_branch
      %23 = sbr.rel (0) target = $region13
    $region12: #{tpu_custom_call.1} parent=1 // pred_region
      _
    $region13: #{tpu_custom_call.1} parent=1 // pred_fallthru
      _
    // Predicated region
    $region14: #{tpu_custom_call.1} parent=1 // pred_check
      _
    $region15: #{tpu_custom_call.1} parent=1 // pred_check_branch
      %25 = sbr.rel (0) target = $region17
    $region16: #{tpu_custom_call.1} parent=1 // pred_region
      %26 = dma.done [#allocation5], 128
    $region17: #{tpu_custom_call.1} parent=1 // pred_fallthru
      _
    %p27 = scmp.eq.s32.totalorder 0, 0
    // Predicated region
    $region18: #{tpu_custom_call.1} parent=1 // pred_check
      %p28 = pneg %p27
    $region19: #{tpu_custom_call.1} parent=1 // pred_check_branch
      %30 = sbr.rel (%p28) target = $region21
    $region20: #{tpu_custom_call.1} parent=1 // pred_region
      %31 = vst [vmem:[#allocation2] sm:$0xff] 0.0
    $region21: #{tpu_custom_call.1} parent=1 // pred_fallthru
      _
    %s32 = smul.u32 0, 128
    %s33 = sshra.s32 %s32, 7
    %s34 = sand.u32 %s32, 127
    %s35 = scalar_lea.vmem %s1, %s33
    %v36 = vld [vmem:[%s35] sm:$0x1]
    %p37 = scmp.lt.s32.totalorder 0, 0
    // Predicated region
    $region22: #{tpu_custom_call.1} parent=1 // pred_check
      %p38 = pneg %p37
    $region23: #{tpu_custom_call.1} parent=1 // pred_check_branch
      %40 = sbr.rel (%p38) target = $region25
    $region24: #{tpu_custom_call.1} parent=1 // pred_region
      %v41 = vld [vmem:[#allocation4] sm:$0xff]
      %v43 = vlaneseq
      %v44 = vshrl.u32 %v43, 7
      %v45 = vsub.s32 0, %v44
      %v46 = vrot.slane %v36, %v45
      %v48 = vmul.f32 %v41, %v46
      %v49 = vld [vmem:[#allocation2] sm:$0xff]
      %v50 = vadd.f32 %v49, %v48
      %51 = vst [vmem:[#allocation2] sm:$0xff] %v50
    $region25: #{tpu_custom_call.1} parent=1 // pred_fallthru
      _
    // Predicated region
    $region26: #{tpu_custom_call.1} parent=1 // pred_check
      %p52 = pneg %p27
    $region27: #{tpu_custom_call.1} parent=1 // pred_check_branch
      %54 = sbr.rel (%p52) target = $region29
    $region28: #{tpu_custom_call.1} parent=1 // pred_region
      %v55 = vld [vmem:[#allocation4] sm:$0xff]
      %v57 = vlaneseq
      %v58 = vshrl.u32 %v57, 7
      %v59 = vsub.s32 0, %v58
      %v60 = vrot.slane %v36, %v59
      %v62 = vmul.f32 %v55, %v60
      %v63 = vlaneseq
      %v64 = vand.u32 %v63, 127
      %vm65 = vcmp.lt.s32.totalorder %v64, 32
      %v66 = vsel %vm65, %v62, 0.0
      %v67 = vld [vmem:[#allocation2] sm:$0xff]
      %v68 = vadd.f32 %v67, %v66
      %69 = vst [vmem:[#allocation2] sm:$0xff] %v68
      %v70 = vld [vmem:[#allocation2] sm:$0xff]
      %71 = vadd.xlane.f32.xlu0 %v70
      %v72 = vpop.xlane.xlu0 %71
      %s73 = sld [smem:[#allocation3]]
      %v74 = vstv %s73
      %v75 = vadd.f32 %v72, %v74
      %vm76 = vcmask 7168
      %77 = vst.msk [vmem:[%s3] sm:$0xff] %vm76, %v75
    $region29: #{tpu_custom_call.1} parent=1 // pred_fallthru
      _
    // Predicated region
    $region30: #{tpu_custom_call.1} parent=1 // pred_check
      _
    $region31: #{tpu_custom_call.1} parent=1 // pred_check_branch
      %79 = sbr.rel (0) target = $region33
    $region32: #{tpu_custom_call.1} parent=1 // pred_region
      _
    $region33: #{tpu_custom_call.1} parent=1 // pred_fallthru
      _
    // Predicated region
    $region34: #{tpu_custom_call.1} parent=1 // pred_check
      _
    $region35: #{tpu_custom_call.1} parent=1 // pred_check_branch
      %81 = sbr.rel (0) target = $region37
    $region36: #{tpu_custom_call.1} parent=1 // pred_region
      _
    $region37: #{tpu_custom_call.1} parent=1 // pred_fallthru
      _
    %82 = vsyncpa [#allocation5], 1

</llo_original>
